<compile_context>
chip_gen: v6e
topology: v6e:2x2x1
jax: 0.10.0
libtpu: 0.0.40
codegen_flags: <defaults>
</compile_context>

<pallas_src>
import functools

import jax
import jax.numpy as jnp
from jax.experimental import pallas as pl
from jax.experimental.pallas import tpu as pltpu


def _sse_kernel(d_ref, b_ref, l_ref, o_ref, acc_ref, *,
                rows_total, tm, tiles_per_core, needs_mask):
    """Per-core partial sum of squared errors of (base + diff_preds - labels)."""
    c = pl.program_id(0)          # core / parallel axis
    k = pl.program_id(1)          # sequential reduction axis (row tiles)

    @pl.when(k == 0)
    def _():
        acc_ref[...] = jnp.zeros_like(acc_ref)

    diff = (b_ref[...].astype(jnp.float32)
            + d_ref[...].astype(jnp.float32)
            - l_ref[...].astype(jnp.float32))
    sq = diff * diff

    if needs_mask:
        # Rows past the true row count (partial last tile or fully
        # out-of-range tiles) contain unspecified data -> zero them.
        tile_idx = c * tiles_per_core + k
        row_ids = tile_idx * tm + jax.lax.broadcasted_iota(jnp.int32, sq.shape, 0)
        sq = jnp.where(row_ids < rows_total, sq, jnp.float32(0.0))

    acc_ref[...] += sq            # pure elementwise (VPU) accumulation

    @pl.when(k == pl.num_programs(1) - 1)
    def _():
        # Single cross-lane/sublane reduction per core, only at the end.
        o_ref[...] = jnp.sum(acc_ref[...]).reshape(1, 1, 1)


def _choose_lane_extent(shape, lane_cap):
    """Largest suffix product of `shape` that is a multiple of 128 and <= cap.

    Falls back to the raw last dim (legal as a full-extent lane block)."""
    best = None
    suffix = 1
    for d in reversed(shape):
        suffix *= d
        if suffix % 128 == 0 and suffix <= lane_cap:
            best = suffix
    return best if best is not None else shape[-1]


def diff_rmsle_loss_val(diff_preds, base, labels, *,
                        target_block_bytes=2 * 1024 * 1024,
                        lane_cap=8192):
    """Pallas equivalent of DiffRMSLELossVAL.forward.

    Returns sqrt(mean((base + diff_preds - labels) ** 2)) as a scalar f32.
    """
    assert diff_preds.shape == base.shape == labels.shape
    shape = diff_preds.shape
    n_elems = 1
    for s in shape:
        n_elems *= s

    # ---- lane-dense, pad-free 2D view (free reshape of contiguous data) ----
    L = _choose_lane_extent(shape, lane_cap)
    Mr = n_elems // L

    d2 = jnp.reshape(diff_preds, (Mr, L))
    b2 = jnp.reshape(base, (Mr, L))
    l2 = jnp.reshape(labels, (Mr, L))

    itemsize = max(jnp.dtype(x.dtype).itemsize for x in (d2, b2, l2))

    # ---- row-tile size: largest tile within ~target_block_bytes per input ----
    tm_raw = max(1, target_block_bytes // (L * itemsize))
    if tm_raw >= Mr:
        tm = Mr                              # one block covers all rows
    else:
        tm = max(8, (tm_raw // 8) * 8)       # multiple of 8 sublanes
        if tm >= Mr:
            tm = Mr
    num_tiles = pl.cdiv(Mr, tm)

    # ---- split the reduction across (up to) two TensorCores (v7x) ----
    nc = 2 if num_tiles >= 2 else 1
    tpc = pl.cdiv(num_tiles, nc)
    needs_mask = (nc * tpc * tm) != Mr

    def in_map(c, k):
        # Clamp fully out-of-range tiles back into bounds; the in-kernel row
        # mask zeroes their contribution, so the re-read data is irrelevant.
        return (jnp.minimum(c * tpc + k, num_tiles - 1), 0)

    def out_map(c, k):
        return (c, 0, 0)

    block_bytes = sum(tm * L * jnp.dtype(x.dtype).itemsize for x in (d2, b2, l2))
    acc_bytes = tm * L * 4
    vmem_limit = int(min(max(2 * block_bytes + acc_bytes + 8 * 1024 * 1024,
                             24 * 1024 * 1024),
                         64 * 1024 * 1024))

    kernel = functools.partial(
        _sse_kernel,
        rows_total=Mr, tm=tm, tiles_per_core=tpc, needs_mask=needs_mask)

    partials = pl.pallas_call(
        kernel,
        out_shape=jax.ShapeDtypeStruct((nc, 1, 1), jnp.float32),
        grid_spec=pltpu.PrefetchScalarGridSpec(
            num_scalar_prefetch=0,
            grid=(nc, tpc),
            in_specs=[
                pl.BlockSpec((tm, L), in_map),
                pl.BlockSpec((tm, L), in_map),
                pl.BlockSpec((tm, L), in_map),
            ],
            out_specs=pl.BlockSpec((1, 1, 1), out_map),
            scratch_shapes=[pltpu.VMEM((tm, L), jnp.float32)],
        ),
        compiler_params=pltpu.CompilerParams(
            dimension_semantics=("parallel", "arbitrary"),
            vmem_limit_bytes=vmem_limit,
        ),
    )(d2, b2, l2)

    # Finish: mean over the TRUE element count, then sqrt (tiny wrapper op).
    return jnp.sqrt(jnp.sum(partials) / jnp.float32(n_elems))


if __name__ == "__main__":
    key = jax.random.PRNGKey(0)
    k1, k2, k3 = jax.random.split(key, 3)

    # Shapes implied by the module: [bs x 3 x N x T]
    bs, C, N, T = 2, 3, 16, 8
    diff_preds = jax.random.normal(k1, (bs, C, N, T), dtype=jnp.float32)
    base = jax.random.normal(k2, (bs, C, N, T), dtype=jnp.float32)
    labels = jax.random.normal(k3, (bs, C, N, T), dtype=jnp.float32)

    loss = jax.block_until_ready(diff_rmsle_loss_val(diff_preds, base, labels))
    ref = jnp.sqrt(jnp.mean((base + diff_preds - labels) ** 2))
    assert jnp.allclose(loss, ref, rtol=1e-5, atol=1e-6), (loss, ref)

    # Extra check: odd row count + tiny forced tiles exercises multi-tile,
    # two-way core split, tile clamping and in-kernel tail masking (bf16 in).
    k4, k5, k6 = jax.random.split(jax.random.PRNGKey(1), 3)
    shp = (4, 3, 17, 8)
    d_b = jax.random.normal(k4, shp, dtype=jnp.bfloat16)
    b_b = jax.random.normal(k5, shp, dtype=jnp.bfloat16)
    l_b = jax.random.normal(k6, shp, dtype=jnp.bfloat16)
    loss2 = jax.block_until_ready(
        diff_rmsle_loss_val(d_b, b_b, l_b, target_block_bytes=512, lane_cap=128))
    ref2 = jnp.sqrt(jnp.mean(
        (b_b.astype(jnp.float32) + d_b.astype(jnp.float32)
         - l_b.astype(jnp.float32)) ** 2))
    assert jnp.allclose(loss2, ref2, rtol=1e-4, atol=1e-5), (loss2, ref2)

    print("KERNEL_OK")
</pallas_src>

<mosaic_0001>
module attributes {stable_mosaic.version = 11 : i64} {
  func.func @_sse_kernel(%arg0: i32, %arg1: i32, %arg2: memref<1x768xf32, #tpu.memory_space<vmem>>, %arg3: memref<1x768xf32, #tpu.memory_space<vmem>>, %arg4: memref<1x768xf32, #tpu.memory_space<vmem>>, %arg5: memref<1x1x1xf32, #tpu.memory_space<vmem>>, %arg6: memref<1x768xf32, #tpu.memory_space<vmem>>) attributes {dimension_semantics = [#tpu.dimension_semantics<parallel>, #tpu.dimension_semantics<arbitrary>], iteration_bounds = array<i64: 1, 1>, scalar_prefetch = 0 : i64, scratch_operands = 1 : i64, tpu.core_type = #tpu.core_type<tc>, window_params = [{transform_indices = @transform_0, window_bounds = array<i64: 1, 768>}, {transform_indices = @transform_1, window_bounds = array<i64: 1, 768>}, {transform_indices = @transform_2, window_bounds = array<i64: 1, 768>}, {transform_indices = @transform_3, window_bounds = array<i64: 1, 1, 1>}]} {
    %c0_i32 = arith.constant 0 : i32
    %0 = arith.cmpi eq, %arg1, %c0_i32 : i32
    %1 = arith.extui %0 : i1 to i32
    %c0_i32_0 = arith.constant 0 : i32
    %2 = arith.cmpi ne, %1, %c0_i32_0 : i32
    scf.if %2 {
      %cst = arith.constant 0.000000e+00 : f32
      %15 = vector.broadcast %cst : f32 to vector<1x768xf32>
      %c0_12 = arith.constant 0 : index
      %c0_13 = arith.constant 0 : index
      %16 = vector.load %arg6[%c0_12, %c0_13] : memref<1x768xf32, #tpu.memory_space<vmem>>, vector<1x768xf32>
      tpu.vector_store %arg6[%c0_12, %c0_13], %15 {strides = array<i32>} : memref<1x768xf32, #tpu.memory_space<vmem>>, vector<1x768xf32>,
    } else {
    }
    %c0 = arith.constant 0 : index
    %c0_1 = arith.constant 0 : index
    %3 = vector.load %arg3[%c0, %c0_1] : memref<1x768xf32, #tpu.memory_space<vmem>>, vector<1x768xf32>
    %c0_2 = arith.constant 0 : index
    %c0_3 = arith.constant 0 : index
    %4 = vector.load %arg2[%c0_2, %c0_3] : memref<1x768xf32, #tpu.memory_space<vmem>>, vector<1x768xf32>
    %5 = arith.addf %3, %4 : vector<1x768xf32>
    %c0_4 = arith.constant 0 : index
    %c0_5 = arith.constant 0 : index
    %6 = vector.load %arg4[%c0_4, %c0_5] : memref<1x768xf32, #tpu.memory_space<vmem>>, vector<1x768xf32>
    %7 = arith.subf %5, %6 : vector<1x768xf32>
    %8 = arith.mulf %7, %7 : vector<1x768xf32>
    %c0_6 = arith.constant 0 : index
    %c0_7 = arith.constant 0 : index
    %9 = vector.load %arg6[%c0_6, %c0_7] : memref<1x768xf32, #tpu.memory_space<vmem>>, vector<1x768xf32>
    %10 = arith.addf %9, %8 : vector<1x768xf32>
    %c0_8 = arith.constant 0 : index
    %c0_9 = arith.constant 0 : index
    %11 = vector.load %arg6[%c0_8, %c0_9] : memref<1x768xf32, #tpu.memory_space<vmem>>, vector<1x768xf32>
    tpu.vector_store %arg6[%c0_8, %c0_9], %10 {strides = array<i32>} : memref<1x768xf32, #tpu.memory_space<vmem>>, vector<1x768xf32>,
    %c0_i32_10 = arith.constant 0 : i32
    %12 = arith.cmpi eq, %arg1, %c0_i32_10 : i32
    %13 = arith.extui %12 : i1 to i32
    %c0_i32_11 = arith.constant 0 : i32
    %14 = arith.cmpi ne, %13, %c0_i32_11 : i32
    scf.if %14 {
      %c0_12 = arith.constant 0 : index
      %c0_13 = arith.constant 0 : index
      %15 = vector.load %arg6[%c0_12, %c0_13] : memref<1x768xf32, #tpu.memory_space<vmem>>, vector<1x768xf32>
      %16 = vector.shape_cast %15 : vector<1x768xf32> to vector<1x1x768xf32>
      %cst = arith.constant dense<0.000000e+00> : vector<1xf32>
      %17 = vector.multi_reduction <add>, %16, %cst [1, 2] : vector<1x1x768xf32> to vector<1xf32>
      %18 = vector.shape_cast %17 : vector<1xf32> to vector<1x1x1xf32>
      %19 = vector.extract %18[0, 0, 0] : f32 from vector<1x1x1xf32>
      %20 = vector.broadcast %19 : f32 to vector<1x1x1xf32>
      %c0_14 = arith.constant 0 : index
      %c0_15 = arith.constant 0 : index
      %c0_16 = arith.constant 0 : index
      %21 = vector.load %arg5[%c0_14, %c0_15, %c0_16] : memref<1x1x1xf32, #tpu.memory_space<vmem>>, vector<1x1x1xf32>
      tpu.vector_store %arg5[%c0_14, %c0_15, %c0_16], %20 {strides = array<i32>} : memref<1x1x1xf32, #tpu.memory_space<vmem>>, vector<1x1x1xf32>,
    } else {
    }
    return
  }
  func.func @transform_0(%arg0: i32, %arg1: i32) -> (i32, i32) {
    %c1_i32 = arith.constant 1 : i32
    %0 = arith.muli %arg0, %c1_i32 : i32
    %1 = arith.addi %0, %arg1 : i32
    %c0_i32 = arith.constant 0 : i32
    %2 = arith.minsi %1, %c0_i32 : i32
    %c0_i32_0 = arith.constant 0 : i32
    %c0_i32_1 = arith.constant 0 : i32
    return %2, %c0_i32_0 : i32, i32
  }
  func.func @transform_1(%arg0: i32, %arg1: i32) -> (i32, i32) {
    %c1_i32 = arith.constant 1 : i32
    %0 = arith.muli %arg0, %c1_i32 : i32
    %1 = arith.addi %0, %arg1 : i32
    %c0_i32 = arith.constant 0 : i32
    %2 = arith.minsi %1, %c0_i32 : i32
    %c0_i32_0 = arith.constant 0 : i32
    %c0_i32_1 = arith.constant 0 : i32
    return %2, %c0_i32_0 : i32, i32
  }
  func.func @transform_2(%arg0: i32, %arg1: i32) -> (i32, i32) {
    %c1_i32 = arith.constant 1 : i32
    %0 = arith.muli %arg0, %c1_i32 : i32
    %1 = arith.addi %0, %arg1 : i32
    %c0_i32 = arith.constant 0 : i32
    %2 = arith.minsi %1, %c0_i32 : i32
    %c0_i32_0 = arith.constant 0 : i32
    %c0_i32_1 = arith.constant 0 : i32
    return %2, %c0_i32_0 : i32, i32
  }
  func.func @transform_3(%arg0: i32, %arg1: i32) -> (i32, i32, i32) {
    %c0_i32 = arith.constant 0 : i32
    %c0_i32_0 = arith.constant 0 : i32
    %c0_i32_1 = arith.constant 0 : i32
    return %arg0, %c0_i32, %c0_i32_0 : i32, i32, i32
  }
}

</mosaic_0001>

<llo_original>
// kernel: tpu_custom_call.1
$region0: #{tpu_custom_call.1}
  #allocation0 [shape = 'u32[]', space=smem, size = 0x4, offset = 0x4, fixed_abs, tag = 'smem constant byte address 0x4 - core index']
  #allocation1 [shape = 'u32[144,128]{1,0:T(1,128)}', space=vmem, size = 0x12000, scoped, tag = 'internal scratch']
  #allocation2 [shape = 'f32[1,768]{1,0:T(1,128)}', space=vmem, size = 0xc00, scoped, tag = 'scratch operand']
  %s0 = inlined_call_operand.hbm [shape: f32[1,768], index: 0, kind: input, shape index: {}]
  %s1 = inlined_call_operand.hbm [shape: f32[1,768], index: 1, kind: input, shape index: {}]
  %s2 = inlined_call_operand.hbm [shape: f32[1,768], index: 2, kind: input, shape index: {}]
  %s3 = inlined_call_operand.hbm [shape: f32[1,1,1], index: 3, kind: output, shape index: {}]
  %s4 = sld [smem:[#allocation0]]
  $region42: #{tpu_custom_call.1} parent=0
    _
  %s6 = ssub.s32 1, %s4
  %s7 = scalar_select 0, %s6, %s4
  $region1: #{tpu_custom_call.1} parent=0
    #allocation3 [shape = 'u8[3072]{0}', space=vmem, size = 0xc00, scoped, tag = 'input window, operand 0, single buffered']
    #allocation4 [shape = 's32[1]{0}', space=sflag, size = 0x4, scoped, tag = 'scoped memory for tpu_custom_call.1']
    #allocation5 [shape = 's32[1]{0}', space=sflag, size = 0x4, scoped, tag = 'scoped memory for tpu_custom_call.1']
    #allocation6 [shape = 'u8[3072]{0}', space=vmem, size = 0xc00, scoped, tag = 'input window, operand 1, single buffered']
    #allocation7 [shape = 's32[1]{0}', space=sflag, size = 0x4, scoped, tag = 'scoped memory for tpu_custom_call.1']
    #allocation8 [shape = 'u8[3072]{0}', space=vmem, size = 0xc00, scoped, tag = 'input window, operand 2, single buffered']
    #allocation9 [shape = 'u8[512]{0}', space=vmem, size = 0x400, scoped, tag = 'output window, operand 0, single buffered']
    %8 = vsyncpa [#allocation4], 0
    %9 = vsyncpa [#allocation7], 0
    %10 = vsyncpa [#allocation5], 0
    // Predicated region
    $region2: #{tpu_custom_call.1} parent=1 // pred_check
      _
    $region3: #{tpu_custom_call.1} parent=1 // pred_check_branch
      %12 = sbr.rel (0) target = $region5
    $region4: #{tpu_custom_call.1} parent=1 // pred_region
      %s13 = sadd.s32 0, 0
      %p14 = scmp.lt.s32.totalorder %s13, 0
      %s15 = scalar_select %p14, %s13, 0
      %s17 = ssub.s32 96, 96
      %18 = vsyncadd [#allocation4], %s17
      %s19 = smul.addr %s15, 6
      %s20 = smul.addr %s19, 16
      %s21 = scalar_lea.hbm %s0, %s20
      %s23 = sshll.u32 [#allocation3], 4
      %s24 = int_to_ptr.vmem [resolvable:$true] %s23
      %26 = dma.hbm_to_vmem [thread:$0]  %s21, 96, %s24, [#allocation4]
    $region5: #{tpu_custom_call.1} parent=1 // pred_fallthru
      _
    // Predicated region
    $region6: #{tpu_custom_call.1} parent=1 // pred_check
      _
    $region7: #{tpu_custom_call.1} parent=1 // pred_check_branch
      %28 = sbr.rel (0) target = $region9
    $region8: #{tpu_custom_call.1} parent=1 // pred_region
      %s29 = sadd.s32 0, 0
      %p30 = scmp.lt.s32.totalorder %s29, 0
      %s31 = scalar_select %p30, %s29, 0
      %s33 = ssub.s32 96, 96
      %34 = vsyncadd [#allocation7], %s33
      %s35 = smul.addr %s31, 6
      %s36 = smul.addr %s35, 16
      %s37 = scalar_lea.hbm %s1, %s36
      %s39 = sshll.u32 [#allocation6], 4
      %s40 = int_to_ptr.vmem [resolvable:$true] %s39
      %42 = dma.hbm_to_vmem [thread:$0]  %s37, 96, %s40, [#allocation7]
    $region9: #{tpu_custom_call.1} parent=1 // pred_fallthru
      _
    // Predicated region
    $region10: #{tpu_custom_call.1} parent=1 // pred_check
      _
    $region11: #{tpu_custom_call.1} parent=1 // pred_check_branch
      %44 = sbr.rel (0) target = $region13
    $region12: #{tpu_custom_call.1} parent=1 // pred_region
      %s45 = sadd.s32 0, 0
      %p46 = scmp.lt.s32.totalorder %s45, 0
      %s47 = scalar_select %p46, %s45, 0
      %s49 = ssub.s32 96, 96
      %50 = vsyncadd [#allocation7], %s49
      %s51 = smul.addr %s47, 6
      %s52 = smul.addr %s51, 16
      %s53 = scalar_lea.hbm %s2, %s52
      %s55 = sshll.u32 [#allocation8], 4
      %s56 = int_to_ptr.vmem [resolvable:$true] %s55
      %58 = dma.hbm_to_vmem [thread:$0]  %s53, 96, %s56, [#allocation7]
    $region13: #{tpu_custom_call.1} parent=1 // pred_fallthru
      _
    // Predicated region
    $region14: #{tpu_custom_call.1} parent=1 // pred_check
      _
    $region15: #{tpu_custom_call.1} parent=1 // pred_check_branch
      %60 = sbr.rel (0) target = $region17
    $region16: #{tpu_custom_call.1} parent=1 // pred_region
      %61 = dma.done [#allocation4], 96
    $region17: #{tpu_custom_call.1} parent=1 // pred_fallthru
      _
    // Predicated region
    $region18: #{tpu_custom_call.1} parent=1 // pred_check
      _
    $region19: #{tpu_custom_call.1} parent=1 // pred_check_branch
      %63 = sbr.rel (0) target = $region21
    $region20: #{tpu_custom_call.1} parent=1 // pred_region
      %64 = dma.done [#allocation7], 96
    $region21: #{tpu_custom_call.1} parent=1 // pred_fallthru
      _
    // Predicated region
    $region22: #{tpu_custom_call.1} parent=1 // pred_check
      _
    $region23: #{tpu_custom_call.1} parent=1 // pred_check_branch
      %66 = sbr.rel (0) target = $region25
    $region24: #{tpu_custom_call.1} parent=1 // pred_region
      %67 = dma.done [#allocation7], 96
    $region25: #{tpu_custom_call.1} parent=1 // pred_fallthru
      _
    %s68 = sadd.s32 0, 0
    %p69 = scmp.lt.s32.totalorder %s68, 0
    %s70 = scalar_select %p69, %s68, 0
    %s71 = sadd.s32 0, 0
    %p72 = scmp.lt.s32.totalorder %s71, 0
    %s73 = scalar_select %p72, %s71, 0
    %s74 = sadd.s32 0, 0
    %p75 = scmp.lt.s32.totalorder %s74, 0
    %s76 = scalar_select %p75, %s74, 0
    %p77 = scmp.eq.s32.totalorder 0, 0
    // Predicated region
    $region26: #{tpu_custom_call.1} parent=1 // pred_check
      %p78 = pneg %p77
    $region27: #{tpu_custom_call.1} parent=1 // pred_check_branch
      %80 = sbr.rel (%p78) target = $region29
    $region28: #{tpu_custom_call.1} parent=1 // pred_region
      %v81 = vlaneseq
      %vm82 = vcmp.ge.s32.totalorder %v81, 0
      %vm83 = vcmp.lt.s32.totalorder %v81, 768
      %vm84 = vmand %vm82, %vm83
      %85 = vst.msk [vmem:[#allocation2] sm:$0x3f] %vm84, 0.0
    $region29: #{tpu_custom_call.1} parent=1 // pred_fallthru
      _
    %v86 = vld [vmem:[#allocation6] sm:$0x3f]
    %v87 = vld [vmem:[#allocation3] sm:$0x3f]
    %v88 = vadd.f32 %v86, %v87
    %v89 = vld [vmem:[#allocation8] sm:$0x3f]
    %v90 = vsub.f32 %v88, %v89
    %v91 = vmul.f32 %v90, %v90
    %v92 = vld [vmem:[#allocation2] sm:$0x3f]
    %v93 = vadd.f32 %v92, %v91
    %v94 = vlaneseq
    %vm95 = vcmp.ge.s32.totalorder %v94, 0
    %vm96 = vcmp.lt.s32.totalorder %v94, 768
    %vm97 = vmand %vm95, %vm96
    %98 = vst.msk [vmem:[#allocation2] sm:$0x3f] %vm97, %v93
    // Predicated region
    $region30: #{tpu_custom_call.1} parent=1 // pred_check
      %p99 = pneg %p77
    $region31: #{tpu_custom_call.1} parent=1 // pred_check_branch
      %101 = sbr.rel (%p99) target = $region33
    $region32: #{tpu_custom_call.1} parent=1 // pred_region
      %v102 = vld [vmem:[#allocation2] sm:$0x3f]
      %v104 = vlaneseq
      %v105 = vshrl.u32 %v104, 7
      %v106 = vsub.s32 0, %v105
      %v107 = vrot.slane %v102, %v106
      %v108 = vlaneseq
      %v109 = vshrl.u32 %v108, 7
      %v110 = vsub.s32 1, %v109
      %v111 = vrot.slane %v102, %v110
      %v112 = vlaneseq
      %v113 = vshrl.u32 %v112, 7
      %v114 = vsub.s32 2, %v113
      %v115 = vrot.slane %v102, %v114
      %v116 = vlaneseq
      %v117 = vshrl.u32 %v116, 7
      %v118 = vsub.s32 3, %v117
      %v119 = vrot.slane %v102, %v118
      %v120 = vlaneseq
      %v121 = vshrl.u32 %v120, 7
      %v122 = vsub.s32 4, %v121
      %v123 = vrot.slane %v102, %v122
      %v124 = vlaneseq
      %v125 = vshrl.u32 %v124, 7
      %v126 = vsub.s32 5, %v125
      %v127 = vrot.slane %v102, %v126
      %vm134 = vcmask 1040384
      %v135 = vsel %vm134, %v107, 0.0
      %v136 = vsel %vm134, %v111, 0.0
      %v137 = vadd.f32 %v135, %v136
      %v138 = vsel %vm134, %v115, 0.0
      %v139 = vadd.f32 %v137, %v138
      %v140 = vsel %vm134, %v119, 0.0
      %v141 = vadd.f32 %v139, %v140
      %v142 = vsel %vm134, %v123, 0.0
      %v143 = vadd.f32 %v141, %v142
      %v144 = vsel %vm134, %v127, 0.0
      %v145 = vadd.f32 %v143, %v144
      %146 = vadd.xlane.f32.xlu0 %v145
      %v147 = vpop.xlane.xlu0 %146
      %v148 = vrot.slane %v147, 4
      %v149 = vadd.f32 %v147, %v148
      %v150 = vrot.slane %v149, 2
      %v151 = vadd.f32 %v149, %v150
      %v152 = vrot.slane %v151, 1
      %v153 = vadd.f32 %v151, %v152
      %s154 = vtos %v153
      %v155 = vstv %s154
      %vm156 = vcmask 0
      %157 = vst.msk [vmem:[#allocation9] sm:$0x1] %vm156, %v155
    $region33: #{tpu_custom_call.1} parent=1 // pred_fallthru
      _
    // Predicated region
    $region34: #{tpu_custom_call.1} parent=1 // pred_check
      _
    $region35: #{tpu_custom_call.1} parent=1 // pred_check_branch
      %159 = sbr.rel (0) target = $region37
    $region36: #{tpu_custom_call.1} parent=1 // pred_region
      %s161 = ssub.s32 16, 16
      %162 = vsyncadd [#allocation5], %s161
      %s164 = sshll.u32 [#allocation9], 4
      %s165 = int_to_ptr.vmem [resolvable:$true] %s164
      %167 = dma.vmem_to_hbm [thread:$0]  %s165, 16, %s3, [#allocation5]
    $region37: #{tpu_custom_call.1} parent=1 // pred_fallthru
      _
    // Predicated region
    $region38: #{tpu_custom_call.1} parent=1 // pred_check
      _
    $region39: #{tpu_custom_call.1} parent=1 // pred_check_branch
      %169 = sbr.rel (0) target = $region41
    $region40: #{tpu_custom_call.1} parent=1 // pred_region
      %170 = dma.done [#allocation5], 16
    $region41: #{tpu_custom_call.1} parent=1 // pred_fallthru
      _
    %171 = vsyncpa [#allocation4], 1
    %172 = vsyncpa [#allocation7], 1
    %173 = vsyncpa [#allocation5], 1

</llo_original>
